<compile_context>
chip_gen: v6e
topology: v6e:2x2x1
jax: 0.10.0
libtpu: 0.0.40
codegen_flags: <defaults>
</compile_context>

<pallas_src>
import jax
import jax.numpy as jnp
from jax.experimental import pallas as pl
from jax.experimental.pallas import tpu as pltpu

BN_EPS = 1e-5
LANE = 128
# Explicit scoped-VMEM cap; our per-step working set is a few MiB, and 64 MiB
# is within every generation's physical VMEM (v7x has 64 MiB per TensorCore).
VMEM_LIMIT = 64 * 1024 * 1024


# ------------------------------ small helpers -------------------------------

def _round_up(n, m=LANE):
    return ((n + m - 1) // m) * m


def _pad_channels(x, c_pad):
    c = x.shape[-1]
    if c == c_pad:
        return x
    pad = [(0, 0)] * (x.ndim - 1) + [(0, c_pad - c)]
    return jnp.pad(x, pad)


def _pick_row_tile(m):
    """Largest row tile <= 512 that divides m (8-aligned); fallback: full m."""
    for t in (512, 256, 128, 64, 32, 16, 8):
        if m % t == 0:
            return t
    return m  # single full block — always layout-legal


# --------------------------- BatchNorm + ReLU --------------------------------

def _bn_stats_kernel(x_ref, sum_ref, sq_ref):
    """Pass 1: per-channel sum and sum-of-squares, accumulated across the
    (row-tile) grid into resident (1, C) output blocks."""
    @pl.when(pl.program_id(0) == 0)
    def _init():
        sum_ref[...] = jnp.zeros_like(sum_ref)
        sq_ref[...] = jnp.zeros_like(sq_ref)

    x = x_ref[...]
    sum_ref[...] += jnp.sum(x, axis=0, keepdims=True)
    sq_ref[...] += jnp.sum(x * x, axis=0, keepdims=True)


def _bn_apply_relu_kernel(x_ref, scale_ref, shift_ref, o_ref):
    """Pass 2: y = max(x * scale + shift, 0), written in bf16."""
    y = jnp.maximum(x_ref[...] * scale_ref[...] + shift_ref[...], 0.0)
    o_ref[...] = y.astype(o_ref.dtype)


def bn_relu(x_nhwc, gamma_pad, beta_pad):
    """Training-mode BatchNorm2d (batch stats, biased var) + ReLU.

    x_nhwc: (N, H, W, Cpad) f32; gamma_pad/beta_pad: (1, Cpad) f32 (zero in
    padded lanes).  Returns (N, H, W, Cpad) bf16.
    """
    n, h, w, c = x_nhwc.shape
    m = n * h * w
    x2 = x_nhwc.reshape(m, c).astype(jnp.float32)
    tm = _pick_row_tile(m)
    grid = (m // tm,)

    s, ss = pl.pallas_call(
        _bn_stats_kernel,
        grid=grid,
        in_specs=[pl.BlockSpec((tm, c), lambda i: (i, 0))],
        out_specs=(pl.BlockSpec((1, c), lambda i: (0, 0)),
                   pl.BlockSpec((1, c), lambda i: (0, 0))),
        out_shape=(jax.ShapeDtypeStruct((1, c), jnp.float32),
                   jax.ShapeDtypeStruct((1, c), jnp.float32)),
        compiler_params=pltpu.CompilerParams(
            dimension_semantics=("arbitrary",),
            vmem_limit_bytes=VMEM_LIMIT),
    )(x2)

    # Tiny per-channel math: precompute scale/shift once (plain JAX).
    mean = s / m
    var = jnp.maximum(ss / m - mean * mean, 0.0)   # guard fp cancellation
    scale = gamma_pad * jax.lax.rsqrt(var + BN_EPS)
    shift = beta_pad - mean * scale

    y2 = pl.pallas_call(
        _bn_apply_relu_kernel,
        grid=grid,
        in_specs=[pl.BlockSpec((tm, c), lambda i: (i, 0)),
                  pl.BlockSpec((1, c), lambda i: (0, 0)),
                  pl.BlockSpec((1, c), lambda i: (0, 0))],
        out_specs=pl.BlockSpec((tm, c), lambda i: (i, 0)),
        out_shape=jax.ShapeDtypeStruct((m, c), jnp.bfloat16),
        compiler_params=pltpu.CompilerParams(
            dimension_semantics=("parallel",),
            vmem_limit_bytes=VMEM_LIMIT),
    )(x2, scale, shift)
    return y2.reshape(n, h, w, c)


# ------------------------------ convolution ----------------------------------

def _phase_decompose(x, ksize, stride, pad):
    """Spatial pad + stride-phase decomposition (pure layout glue, ~1x HBM).

    Returns:
      phases: (N*P, Hq, Wq, C) bf16 — P stride-phases per image, stacked so
              that rows [b*P, (b+1)*P) are the phases of batch element b.
      taps:   list of (phase_idx, dh, dw), one per (kh, kw) tap, such that
              out[ho, wo] += phases[phase_idx][ho + dh, wo + dw] @ W[kh, kw].
    """
    n, h, w, c = x.shape
    ho = (h + 2 * pad - ksize) // stride + 1
    wo = (w + 2 * pad - ksize) // stride + 1
    xp = jnp.pad(x, ((0, 0), (pad, pad), (pad, pad), (0, 0))) if pad else x
    hq = ho + (ksize - 1) // stride
    wq = wo + (ksize - 1) // stride

    phase_index = {}
    phase_arrays = []
    taps = []
    for kh in range(ksize):
        for kw in range(ksize):
            a, b = kh % stride, kw % stride
            if (a, b) not in phase_index:
                ph = xp[:, a::stride, b::stride, :]
                ph = ph[:, :hq, :wq, :]
                dh_pad = hq - ph.shape[1]
                dw_pad = wq - ph.shape[2]
                if dh_pad or dw_pad:
                    ph = jnp.pad(ph, ((0, 0), (0, dh_pad), (0, dw_pad), (0, 0)))
                phase_index[(a, b)] = len(phase_arrays)
                phase_arrays.append(ph)
            taps.append((phase_index[(a, b)], kh // stride, kw // stride))

    p = len(phase_arrays)
    phases = jnp.stack(phase_arrays, axis=1)            # (N, P, Hq, Wq, C)
    phases = phases.reshape(n * p, hq, wq, c).astype(jnp.bfloat16)
    return phases, taps, p, hq, wq, ho, wo


def _make_conv_kernel(taps, ho, wo, with_residual):
    """Per-image conv kernel: unrolled tap loop of accumulating MXU dots."""

    def accumulate(x_ref, w_ref):
        c = x_ref.shape[-1]
        acc = None
        for t, (ph, dh, dw) in enumerate(taps):
            a = x_ref[ph, dh:dh + ho, dw:dw + wo, :].reshape(ho * wo, c)
            contrib = jnp.dot(a, w_ref[t], preferred_element_type=jnp.float32)
            acc = contrib if acc is None else acc + contrib
        return acc

    if with_residual:
        def kernel(x_ref, w_ref, r_ref, o_ref):
            acc = accumulate(x_ref, w_ref)
            o_ref[...] = (acc.reshape(o_ref.shape) + r_ref[...]).astype(o_ref.dtype)
    else:
        def kernel(x_ref, w_ref, o_ref):
            acc = accumulate(x_ref, w_ref)
            o_ref[...] = acc.reshape(o_ref.shape).astype(o_ref.dtype)
    return kernel


def conv2d_pallas(x_nhwc, w_packed, ksize, stride, pad, cout_pad, residual=None):
    """Conv2d (no bias) with channel-padded NHWC activations.

    x_nhwc:   (N, H, W, Cin_pad) bf16/f32 activations.
    w_packed: (ksize*ksize, Cin_pad, Cout_pad) bf16 pre-packed weights.
    residual: optional (N, Ho, Wo, Cout_pad) f32, added in the kernel epilogue.
    Returns (N, Ho, Wo, Cout_pad) f32.
    """
    n = x_nhwc.shape[0]
    c_pad = x_nhwc.shape[-1]
    phases, taps, p, hq, wq, ho, wo = _phase_decompose(x_nhwc, ksize, stride, pad)
    t = ksize * ksize
    tn = 256 if cout_pad % 256 == 0 else LANE     # 128-aligned; 256 when it fits
    n_j = cout_pad // tn

    kernel = _make_conv_kernel(taps, ho, wo, residual is not None)

    in_specs = [
        # all phases of one image (full reduction stays in-kernel)
        pl.BlockSpec((p, hq, wq, c_pad), lambda b, j: (b, 0, 0, 0)),
        # all taps x full Cin for one Cout tile
        pl.BlockSpec((t, c_pad, tn), lambda b, j: (0, 0, j)),
    ]
    args = [phases, w_packed]
    if residual is not None:
        residual = residual.astype(jnp.float32)
        in_specs.append(pl.BlockSpec((1, ho, wo, tn), lambda b, j: (b, 0, 0, j)))
        args.append(residual)

    flops = 2 * n * ho * wo * c_pad * cout_pad * t
    bytes_accessed = (phases.size * 2 + w_packed.size * 2
                      + n * ho * wo * cout_pad * 4
                      + (residual.size * 4 if residual is not None else 0))

    out = pl.pallas_call(
        kernel,
        grid=(n, n_j),
        in_specs=in_specs,
        out_specs=pl.BlockSpec((1, ho, wo, tn), lambda b, j: (b, 0, 0, j)),
        out_shape=jax.ShapeDtypeStruct((n, ho, wo, cout_pad), jnp.float32),
        compiler_params=pltpu.CompilerParams(
            dimension_semantics=("parallel", "parallel"),
            vmem_limit_bytes=VMEM_LIMIT),
        cost_estimate=pl.CostEstimate(
            flops=flops, transcendentals=0, bytes_accessed=bytes_accessed),
    )(*args)
    return out


def _pack_weights(w_oihw, cin_pad, cout_pad):
    """OIHW f32 -> (kH*kW, Cin_pad, Cout_pad) bf16, taps in (kh, kw) order."""
    cout, cin, kh, kw = w_oihw.shape
    w = jnp.transpose(w_oihw, (2, 3, 1, 0)).reshape(kh * kw, cin, cout)
    w = jnp.pad(w, ((0, 0), (0, cin_pad - cin), (0, cout_pad - cout)))
    return w.astype(jnp.bfloat16)


# ------------------------------ BasicBlock -----------------------------------

class BasicBlockPallas:
    def __init__(self, in_planes, out_planes, stride, dropRate=0.0, key=None):
        self.in_planes = in_planes
        self.out_planes = out_planes
        self.stride = stride
        self.droprate = dropRate
        self.equalInOut = in_planes == out_planes
        key = jax.random.PRNGKey(0) if key is None else key
        ks = jax.random.split(key, 7)

        def conv_init(k, cout, cin, kh, kw):   # kaiming-like, deterministic
            fan = cin * kh * kw
            return (jax.random.normal(k, (cout, cin, kh, kw), jnp.float32)
                    * jnp.sqrt(2.0 / fan))

        # PyTorch-layout parameters (kept for the reference path).
        self.conv1_w = conv_init(ks[0], out_planes, in_planes, 3, 3)
        self.conv2_w = conv_init(ks[1], out_planes, out_planes, 3, 3)
        self.bn1_gamma = 1.0 + 0.1 * jax.random.normal(ks[2], (in_planes,), jnp.float32)
        self.bn1_beta = 0.1 * jax.random.normal(ks[3], (in_planes,), jnp.float32)
        self.bn2_gamma = 1.0 + 0.1 * jax.random.normal(ks[4], (out_planes,), jnp.float32)
        self.bn2_beta = 0.1 * jax.random.normal(ks[5], (out_planes,), jnp.float32)
        self.convShortcut_w = (None if self.equalInOut
                               else conv_init(ks[6], out_planes, in_planes, 1, 1))

        # Hoisted-out-of-forward packing: lane-padded channels, pre-transposed
        # bf16 weights, pre-padded BN affine params.
        self.cin_pad = _round_up(in_planes)
        self.cout_pad = _round_up(out_planes)
        self.conv1_wp = _pack_weights(self.conv1_w, self.cin_pad, self.cout_pad)
        self.conv2_wp = _pack_weights(self.conv2_w, self.cout_pad, self.cout_pad)
        self.convShortcut_wp = (None if self.equalInOut else
                                _pack_weights(self.convShortcut_w,
                                              self.cin_pad, self.cout_pad))
        self.bn1_gamma_p = _pad_channels(self.bn1_gamma.reshape(1, -1), self.cin_pad)
        self.bn1_beta_p = _pad_channels(self.bn1_beta.reshape(1, -1), self.cin_pad)
        self.bn2_gamma_p = _pad_channels(self.bn2_gamma.reshape(1, -1), self.cout_pad)
        self.bn2_beta_p = _pad_channels(self.bn2_beta.reshape(1, -1), self.cout_pad)

    def __call__(self, x_nchw):
        # NCHW -> NHWC once at the block boundary (a full network would keep
        # activations NHWC end-to-end).
        x = jnp.transpose(x_nchw, (0, 2, 3, 1)).astype(jnp.float32)
        xp = _pad_channels(x, self.cin_pad)                       # f32

        a1 = bn_relu(xp, self.bn1_gamma_p, self.bn1_beta_p)       # bf16
        if self.equalInOut:
            shortcut = xp                                         # pre-BN x
        else:
            shortcut = conv2d_pallas(a1, self.convShortcut_wp,
                                     1, self.stride, 0, self.cout_pad)

        out = conv2d_pallas(a1, self.conv1_wp, 3, self.stride, 1, self.cout_pad)
        out = bn_relu(out, self.bn2_gamma_p, self.bn2_beta_p)     # bf16
        # TODO(synk): training-mode dropout for dropRate > 0 not implemented
        # (default dropRate=0.0 makes it a no-op, matching the reference).
        out = conv2d_pallas(out, self.conv2_wp, 3, 1, 1, self.cout_pad,
                            residual=shortcut)                    # +residual fused
        out = out[..., :self.out_planes]
        return jnp.transpose(out, (0, 3, 1, 2))                   # NHWC -> NCHW


# ------------------------------ reference ------------------------------------

def reference_forward(block, x_nchw):
    """Pure-JAX reference.  Convs cast operands to bf16 (f32 accumulation) to
    mirror the kernel's declared MXU precision."""
    x = jnp.transpose(x_nchw, (0, 2, 3, 1)).astype(jnp.float32)

    def bn_relu_ref(x, g, b):
        mean = jnp.mean(x, axis=(0, 1, 2), keepdims=True)
        var = jnp.mean((x - mean) ** 2, axis=(0, 1, 2), keepdims=True)
        return jnp.maximum((x - mean) * jax.lax.rsqrt(var + BN_EPS) * g + b, 0.0)

    def conv_ref(x, w_oihw, stride, pad):
        return jax.lax.conv_general_dilated(
            x.astype(jnp.bfloat16),
            jnp.transpose(w_oihw, (2, 3, 1, 0)).astype(jnp.bfloat16),
            (stride, stride), [(pad, pad), (pad, pad)],
            dimension_numbers=("NHWC", "HWIO", "NHWC"),
            preferred_element_type=jnp.float32)

    if not block.equalInOut:
        x = bn_relu_ref(x, block.bn1_gamma, block.bn1_beta)
        out = x
    else:
        out = bn_relu_ref(x, block.bn1_gamma, block.bn1_beta)
    out = conv_ref(out, block.conv1_w, block.stride, 1)
    out = bn_relu_ref(out, block.bn2_gamma, block.bn2_beta)
    shortcut = x if block.equalInOut else conv_ref(x, block.convShortcut_w,
                                                   block.stride, 0)
    out = conv_ref(out, block.conv2_w, 1, 1) + shortcut
    return jnp.transpose(out, (0, 3, 1, 2))


# --------------------------------- main ---------------------------------------

if __name__ == "__main__":
    key = jax.random.PRNGKey(0)
    k_x, k_p = jax.random.split(key)

    # small shapes: batch=2, in_planes=4 -> out_planes=8, 16x16 spatial, stride=2
    x = jax.random.normal(k_x, (2, 4, 16, 16), jnp.float32)   # NCHW, like PyTorch

    block = BasicBlockPallas(in_planes=4, out_planes=8, stride=2,
                             dropRate=0.0, key=k_p)

    y = block(x)
    y = jax.block_until_ready(y)

    assert y.shape == (2, 8, 8, 8), y.shape
    assert bool(jnp.all(jnp.isfinite(y)))

    y_ref = jax.block_until_ready(reference_forward(block, x))
    assert jnp.allclose(y, y_ref, atol=1e-2, rtol=1e-2), (
        float(jnp.max(jnp.abs(y - y_ref))))

    print("KERNEL_OK")
</pallas_src>

<mosaic_0001>
module attributes {stable_mosaic.version = 11 : i64} {
  func.func @_bn_stats_kernel(%arg0: i32, %arg1: memref<512x128xf32, #tpu.memory_space<vmem>>, %arg2: memref<1x128xf32, #tpu.memory_space<vmem>>, %arg3: memref<1x128xf32, #tpu.memory_space<vmem>>) attributes {dimension_semantics = [#tpu.dimension_semantics<arbitrary>], iteration_bounds = array<i64: 1>, scalar_prefetch = 0 : i64, scratch_operands = 0 : i64, tpu.core_type = #tpu.core_type<tc>, window_params = [{transform_indices = @transform_0, window_bounds = array<i64: 512, 128>}, {pipeline_mode = #tpu.pipeline_mode<synchronous>, transform_indices = @transform_1, window_bounds = array<i64: 1, 128>}, {pipeline_mode = #tpu.pipeline_mode<synchronous>, transform_indices = @transform_2, window_bounds = array<i64: 1, 128>}]} {
    %c0_i32 = arith.constant 0 : i32
    %0 = arith.cmpi eq, %arg0, %c0_i32 : i32
    %1 = arith.extui %0 : i1 to i32
    %c0_i32_0 = arith.constant 0 : i32
    %2 = arith.cmpi ne, %1, %c0_i32_0 : i32
    scf.if %2 {
      %cst_11 = arith.constant 0.000000e+00 : f32
      %15 = vector.broadcast %cst_11 : f32 to vector<1x128xf32>
      %c0_12 = arith.constant 0 : index
      %c0_13 = arith.constant 0 : index
      %16 = vector.load %arg2[%c0_12, %c0_13] : memref<1x128xf32, #tpu.memory_space<vmem>>, vector<1x128xf32>
      tpu.vector_store %arg2[%c0_12, %c0_13], %15 {strides = array<i32>} : memref<1x128xf32, #tpu.memory_space<vmem>>, vector<1x128xf32>,
      %cst_14 = arith.constant 0.000000e+00 : f32
      %17 = vector.broadcast %cst_14 : f32 to vector<1x128xf32>
      %c0_15 = arith.constant 0 : index
      %c0_16 = arith.constant 0 : index
      %18 = vector.load %arg3[%c0_15, %c0_16] : memref<1x128xf32, #tpu.memory_space<vmem>>, vector<1x128xf32>
      tpu.vector_store %arg3[%c0_15, %c0_16], %17 {strides = array<i32>} : memref<1x128xf32, #tpu.memory_space<vmem>>, vector<1x128xf32>,
    } else {
    }
    %c0 = arith.constant 0 : index
    %c0_1 = arith.constant 0 : index
    %3 = vector.load %arg1[%c0, %c0_1] : memref<512x128xf32, #tpu.memory_space<vmem>>, vector<512x128xf32>
    %c0_2 = arith.constant 0 : index
    %c0_3 = arith.constant 0 : index
    %4 = vector.load %arg2[%c0_2, %c0_3] : memref<1x128xf32, #tpu.memory_space<vmem>>, vector<1x128xf32>
    %cst = arith.constant dense<0.000000e+00> : vector<128xf32>
    %5 = vector.multi_reduction <add>, %3, %cst [0] : vector<512x128xf32> to vector<128xf32>
    %6 = vector.shape_cast %5 : vector<128xf32> to vector<1x128xf32>
    %7 = arith.addf %4, %6 : vector<1x128xf32>
    %c0_4 = arith.constant 0 : index
    %c0_5 = arith.constant 0 : index
    %8 = vector.load %arg2[%c0_4, %c0_5] : memref<1x128xf32, #tpu.memory_space<vmem>>, vector<1x128xf32>
    tpu.vector_store %arg2[%c0_4, %c0_5], %7 {strides = array<i32>} : memref<1x128xf32, #tpu.memory_space<vmem>>, vector<1x128xf32>,
    %c0_6 = arith.constant 0 : index
    %c0_7 = arith.constant 0 : index
    %9 = vector.load %arg3[%c0_6, %c0_7] : memref<1x128xf32, #tpu.memory_space<vmem>>, vector<1x128xf32>
    %10 = arith.mulf %3, %3 : vector<512x128xf32>
    %cst_8 = arith.constant dense<0.000000e+00> : vector<128xf32>
    %11 = vector.multi_reduction <add>, %10, %cst_8 [0] : vector<512x128xf32> to vector<128xf32>
    %12 = vector.shape_cast %11 : vector<128xf32> to vector<1x128xf32>
    %13 = arith.addf %9, %12 : vector<1x128xf32>
    %c0_9 = arith.constant 0 : index
    %c0_10 = arith.constant 0 : index
    %14 = vector.load %arg3[%c0_9, %c0_10] : memref<1x128xf32, #tpu.memory_space<vmem>>, vector<1x128xf32>
    tpu.vector_store %arg3[%c0_9, %c0_10], %13 {strides = array<i32>} : memref<1x128xf32, #tpu.memory_space<vmem>>, vector<1x128xf32>,
    return
  }
  func.func @transform_0(%arg0: i32) -> (i32, i32) {
    %c0_i32 = arith.constant 0 : i32
    %c0_i32_0 = arith.constant 0 : i32
    return %arg0, %c0_i32 : i32, i32
  }
  func.func @transform_1(%arg0: i32) -> (i32, i32) {
    %c0_i32 = arith.constant 0 : i32
    %c0_i32_0 = arith.constant 0 : i32
    %c0_i32_1 = arith.constant 0 : i32
    return %c0_i32, %c0_i32_0 : i32, i32
  }
  func.func @transform_2(%arg0: i32) -> (i32, i32) {
    %c0_i32 = arith.constant 0 : i32
    %c0_i32_0 = arith.constant 0 : i32
    %c0_i32_1 = arith.constant 0 : i32
    return %c0_i32, %c0_i32_0 : i32, i32
  }
}

</mosaic_0001>

<llo_original>
// kernel: tpu_custom_call.1
$region0: #{tpu_custom_call.1}
  #allocation0 [shape = 'u32[]', space=smem, size = 0x4, offset = 0x4, fixed_abs, tag = 'smem constant byte address 0x4 - core index']
  #allocation1 [shape = 'u32[144,128]{1,0:T(1,128)}', space=vmem, size = 0x12000, scoped, tag = 'internal scratch']
  %s0 = inlined_call_operand.hbm [shape: f32[512,128], index: 0, kind: input, shape index: {}]
  %s1 = inlined_call_operand.hbm [shape: f32[1,128], index: 1, kind: output, shape index: {0}]
  %s2 = inlined_call_operand.hbm [shape: f32[1,128], index: 2, kind: output, shape index: {1}]
  %3 = xla_tuple %s1, %s2
  %s4 = sld [smem:[#allocation0]]
  $region30: #{tpu_custom_call.1} parent=0
    _
  %s6 = ssub.s32 1, %s4
  %s7 = scalar_select 0, %s6, %s4
  $region1: #{tpu_custom_call.1} parent=0
    #allocation2 [shape = 'u8[262144]{0}', space=vmem, size = 0x40000, scoped, tag = 'input window, operand 0, single buffered']
    #allocation3 [shape = 's32[1]{0}', space=sflag, size = 0x4, scoped, tag = 'scoped memory for tpu_custom_call.1']
    #allocation4 [shape = 's32[1]{0}', space=sflag, size = 0x4, scoped, tag = 'scoped memory for tpu_custom_call.1']
    #allocation5 [shape = 'u8[512]{0}', space=vmem, size = 0x400, scoped, tag = 'output window, operand 0, single buffered']
    #allocation6 [shape = 'u8[512]{0}', space=vmem, size = 0x400, scoped, tag = 'output window, operand 1, single buffered']
    #allocation7 [shape = 's32[1]{0}', space=sflag, size = 0x4, scoped, tag = 'scoped memory for tpu_custom_call.1']
    %8 = vsyncpa [#allocation3], 0
    %9 = vsyncpa [#allocation4], 0
    %10 = vsyncpa [#allocation7], 0
    // Predicated region
    $region2: #{tpu_custom_call.1} parent=1 // pred_check
      _
    $region3: #{tpu_custom_call.1} parent=1 // pred_check_branch
      %12 = sbr.rel (0) target = $region5
    $region4: #{tpu_custom_call.1} parent=1 // pred_region
      %s14 = ssub.s32 8192, 8192
      %15 = vsyncadd [#allocation3], %s14
      %s16 = sshll.u32 [#allocation2], 4
      %s17 = int_to_ptr.vmem [resolvable:$true] %s16
      %22 = dma.hbm_to_vmem [thread:$0]  %s0, 8192, %s17, [#allocation3], 128, 128, 8
    $region5: #{tpu_custom_call.1} parent=1 // pred_fallthru
      _
    // Predicated region
    $region6: #{tpu_custom_call.1} parent=1 // pred_check
      _
    $region7: #{tpu_custom_call.1} parent=1 // pred_check_branch
      %24 = sbr.rel (0) target = $region9
    $region8: #{tpu_custom_call.1} parent=1 // pred_region
      %25 = dma.done [#allocation3], 8192
    $region9: #{tpu_custom_call.1} parent=1 // pred_fallthru
      _
    %p26 = scmp.eq.s32.totalorder 0, 0
    // Predicated region
    $region10: #{tpu_custom_call.1} parent=1 // pred_check
      %p27 = pneg %p26
    $region11: #{tpu_custom_call.1} parent=1 // pred_check_branch
      %29 = sbr.rel (%p27) target = $region13
    $region12: #{tpu_custom_call.1} parent=1 // pred_region
      %30 = vst [vmem:[#allocation5] sm:$0x1] 0.0
      %31 = vst [vmem:[#allocation6] sm:$0x1] 0.0
    $region13: #{tpu_custom_call.1} parent=1 // pred_fallthru
      _
    %v32 = vld [vmem:[#allocation2] sm:$0xff]
    %v33 = vld [vmem:[#allocation2 + $0x8] sm:$0xff]
    %v34 = vld [vmem:[#allocation2 + $0x10] sm:$0xff]
    %v35 = vld [vmem:[#allocation2 + $0x18] sm:$0xff]
    %v36 = vld [vmem:[#allocation2 + $0x20] sm:$0xff]
    %v37 = vld [vmem:[#allocation2 + $0x28] sm:$0xff]
    %v38 = vld [vmem:[#allocation2 + $0x30] sm:$0xff]
    %v39 = vld [vmem:[#allocation2 + $0x38] sm:$0xff]
    %v40 = vld [vmem:[#allocation2 + $0x40] sm:$0xff]
    %v41 = vld [vmem:[#allocation2 + $0x48] sm:$0xff]
    %v42 = vld [vmem:[#allocation2 + $0x50] sm:$0xff]
    %v43 = vld [vmem:[#allocation2 + $0x58] sm:$0xff]
    %v44 = vld [vmem:[#allocation2 + $0x60] sm:$0xff]
    %v45 = vld [vmem:[#allocation2 + $0x68] sm:$0xff]
    %v46 = vld [vmem:[#allocation2 + $0x70] sm:$0xff]
    %v47 = vld [vmem:[#allocation2 + $0x78] sm:$0xff]
    %v48 = vld [vmem:[#allocation2 + $0x80] sm:$0xff]
    %v49 = vld [vmem:[#allocation2 + $0x88] sm:$0xff]
    %v50 = vld [vmem:[#allocation2 + $0x90] sm:$0xff]
    %v51 = vld [vmem:[#allocation2 + $0x98] sm:$0xff]
    %v52 = vld [vmem:[#allocation2 + $0xa0] sm:$0xff]
    %v53 = vld [vmem:[#allocation2 + $0xa8] sm:$0xff]
    %v54 = vld [vmem:[#allocation2 + $0xb0] sm:$0xff]
    %v55 = vld [vmem:[#allocation2 + $0xb8] sm:$0xff]
    %v56 = vld [vmem:[#allocation2 + $0xc0] sm:$0xff]
    %v57 = vld [vmem:[#allocation2 + $0xc8] sm:$0xff]
    %v58 = vld [vmem:[#allocation2 + $0xd0] sm:$0xff]
    %v59 = vld [vmem:[#allocation2 + $0xd8] sm:$0xff]
    %v60 = vld [vmem:[#allocation2 + $0xe0] sm:$0xff]
    %v61 = vld [vmem:[#allocation2 + $0xe8] sm:$0xff]
    %v62 = vld [vmem:[#allocation2 + $0xf0] sm:$0xff]
    %v63 = vld [vmem:[#allocation2 + $0xf8] sm:$0xff]
    %v64 = vld [vmem:[#allocation2 + $0x100] sm:$0xff]
    %v65 = vld [vmem:[#allocation2 + $0x108] sm:$0xff]
    %v66 = vld [vmem:[#allocation2 + $0x110] sm:$0xff]
    %v67 = vld [vmem:[#allocation2 + $0x118] sm:$0xff]
    %v68 = vld [vmem:[#allocation2 + $0x120] sm:$0xff]
    %v69 = vld [vmem:[#allocation2 + $0x128] sm:$0xff]
    %v70 = vld [vmem:[#allocation2 + $0x130] sm:$0xff]
    %v71 = vld [vmem:[#allocation2 + $0x138] sm:$0xff]
    %v72 = vld [vmem:[#allocation2 + $0x140] sm:$0xff]
    %v73 = vld [vmem:[#allocation2 + $0x148] sm:$0xff]
    %v74 = vld [vmem:[#allocation2 + $0x150] sm:$0xff]
    %v75 = vld [vmem:[#allocation2 + $0x158] sm:$0xff]
    %v76 = vld [vmem:[#allocation2 + $0x160] sm:$0xff]
    %v77 = vld [vmem:[#allocation2 + $0x168] sm:$0xff]
    %v78 = vld [vmem:[#allocation2 + $0x170] sm:$0xff]
    %v79 = vld [vmem:[#allocation2 + $0x178] sm:$0xff]
    %v80 = vld [vmem:[#allocation2 + $0x180] sm:$0xff]
    %v81 = vld [vmem:[#allocation2 + $0x188] sm:$0xff]
    %v82 = vld [vmem:[#allocation2 + $0x190] sm:$0xff]
    %v83 = vld [vmem:[#allocation2 + $0x198] sm:$0xff]
    %v84 = vld [vmem:[#allocation2 + $0x1a0] sm:$0xff]
    %v85 = vld [vmem:[#allocation2 + $0x1a8] sm:$0xff]
    %v86 = vld [vmem:[#allocation2 + $0x1b0] sm:$0xff]
    %v87 = vld [vmem:[#allocation2 + $0x1b8] sm:$0xff]
    %v88 = vld [vmem:[#allocation2 + $0x1c0] sm:$0xff]
    %v89 = vld [vmem:[#allocation2 + $0x1c8] sm:$0xff]
    %v90 = vld [vmem:[#allocation2 + $0x1d0] sm:$0xff]
    %v91 = vld [vmem:[#allocation2 + $0x1d8] sm:$0xff]
    %v92 = vld [vmem:[#allocation2 + $0x1e0] sm:$0xff]
    %v93 = vld [vmem:[#allocation2 + $0x1e8] sm:$0xff]
    %v94 = vld [vmem:[#allocation2 + $0x1f0] sm:$0xff]
    %v95 = vld [vmem:[#allocation2 + $0x1f8] sm:$0xff]
    %v96 = vld [vmem:[#allocation5] sm:$0x1]
    %v97 = vadd.f32 %v32, %v33
    %v98 = vadd.f32 %v97, %v34
    %v99 = vadd.f32 %v98, %v35
    %v100 = vadd.f32 %v99, %v36
    %v101 = vadd.f32 %v100, %v37
    %v102 = vadd.f32 %v101, %v38
    %v103 = vadd.f32 %v102, %v39
    %v104 = vadd.f32 %v103, %v40
    %v105 = vadd.f32 %v104, %v41
    %v106 = vadd.f32 %v105, %v42
    %v107 = vadd.f32 %v106, %v43
    %v108 = vadd.f32 %v107, %v44
    %v109 = vadd.f32 %v108, %v45
    %v110 = vadd.f32 %v109, %v46
    %v111 = vadd.f32 %v110, %v47
    %v112 = vadd.f32 %v111, %v48
    %v113 = vadd.f32 %v112, %v49
    %v114 = vadd.f32 %v113, %v50
    %v115 = vadd.f32 %v114, %v51
    %v116 = vadd.f32 %v115, %v52
    %v117 = vadd.f32 %v116, %v53
    %v118 = vadd.f32 %v117, %v54
    %v119 = vadd.f32 %v118, %v55
    %v120 = vadd.f32 %v119, %v56
    %v121 = vadd.f32 %v120, %v57
    %v122 = vadd.f32 %v121, %v58
    %v123 = vadd.f32 %v122, %v59
    %v124 = vadd.f32 %v123, %v60
    %v125 = vadd.f32 %v124, %v61
    %v126 = vadd.f32 %v125, %v62
    %v127 = vadd.f32 %v126, %v63
    %v128 = vadd.f32 %v127, %v64
    %v129 = vadd.f32 %v128, %v65
    %v130 = vadd.f32 %v129, %v66
    %v131 = vadd.f32 %v130, %v67
    %v132 = vadd.f32 %v131, %v68
    %v133 = vadd.f32 %v132, %v69
    %v134 = vadd.f32 %v133, %v70
    %v135 = vadd.f32 %v134, %v71
    %v136 = vadd.f32 %v135, %v72
    %v137 = vadd.f32 %v136, %v73
    %v138 = vadd.f32 %v137, %v74
    %v139 = vadd.f32 %v138, %v75
    %v140 = vadd.f32 %v139, %v76
    %v141 = vadd.f32 %v140, %v77
    %v142 = vadd.f32 %v141, %v78
    %v143 = vadd.f32 %v142, %v79
    %v144 = vadd.f32 %v143, %v80
    %v145 = vadd.f32 %v144, %v81
    %v146 = vadd.f32 %v145, %v82
    %v147 = vadd.f32 %v146, %v83
    %v148 = vadd.f32 %v147, %v84
    %v149 = vadd.f32 %v148, %v85
    %v150 = vadd.f32 %v149, %v86
    %v151 = vadd.f32 %v150, %v87
    %v152 = vadd.f32 %v151, %v88
    %v153 = vadd.f32 %v152, %v89
    %v154 = vadd.f32 %v153, %v90
    %v155 = vadd.f32 %v154, %v91
    %v156 = vadd.f32 %v155, %v92
    %v157 = vadd.f32 %v156, %v93
    %v158 = vadd.f32 %v157, %v94
    %v159 = vadd.f32 %v158, %v95
    %v160 = vrot.slane %v159, 4
    %v161 = vadd.f32 %v159, %v160
    %v162 = vrot.slane %v161, 2
    %v163 = vadd.f32 %v161, %v162
    %v164 = vrot.slane %v163, 1
    %v165 = vadd.f32 %v163, %v164
    %v166 = vadd.f32 %v96, %v165
    %167 = vst [vmem:[#allocation5] sm:$0x1] %v166
    %v168 = vld [vmem:[#allocation6] sm:$0x1]
    %v169 = vmul.f32 %v32, %v32
    %v170 = vmul.f32 %v33, %v33
    %v171 = vmul.f32 %v34, %v34
    %v172 = vmul.f32 %v35, %v35
    %v173 = vmul.f32 %v36, %v36
    %v174 = vmul.f32 %v37, %v37
    %v175 = vmul.f32 %v38, %v38
    %v176 = vmul.f32 %v39, %v39
    %v177 = vmul.f32 %v40, %v40
    %v178 = vmul.f32 %v41, %v41
    %v179 = vmul.f32 %v42, %v42
    %v180 = vmul.f32 %v43, %v43
    %v181 = vmul.f32 %v44, %v44
    %v182 = vmul.f32 %v45, %v45
    %v183 = vmul.f32 %v46, %v46
    %v184 = vmul.f32 %v47, %v47
    %v185 = vmul.f32 %v48, %v48
    %v186 = vmul.f32 %v49, %v49
    %v187 = vmul.f32 %v50, %v50
    %v188 = vmul.f32 %v51, %v51
    %v189 = vmul.f32 %v52, %v52
    %v190 = vmul.f32 %v53, %v53
    %v191 = vmul.f32 %v54, %v54
    %v192 = vmul.f32 %v55, %v55
    %v193 = vmul.f32 %v56, %v56
    %v194 = vmul.f32 %v57, %v57
    %v195 = vmul.f32 %v58, %v58
    %v196 = vmul.f32 %v59, %v59
    %v197 = vmul.f32 %v60, %v60
    %v198 = vmul.f32 %v61, %v61
    %v199 = vmul.f32 %v62, %v62
    %v200 = vmul.f32 %v63, %v63
    %v201 = vmul.f32 %v64, %v64
    %v202 = vmul.f32 %v65, %v65
    %v203 = vmul.f32 %v66, %v66
    %v204 = vmul.f32 %v67, %v67
    %v205 = vmul.f32 %v68, %v68
    %v206 = vmul.f32 %v69, %v69
    %v207 = vmul.f32 %v70, %v70
    %v208 = vmul.f32 %v71, %v71
    %v209 = vmul.f32 %v72, %v72
    %v210 = vmul.f32 %v73, %v73
    %v211 = vmul.f32 %v74, %v74
    %v212 = vmul.f32 %v75, %v75
    %v213 = vmul.f32 %v76, %v76
    %v214 = vmul.f32 %v77, %v77
    %v215 = vmul.f32 %v78, %v78
    %v216 = vmul.f32 %v79, %v79
    %v217 = vmul.f32 %v80, %v80
    %v218 = vmul.f32 %v81, %v81
    %v219 = vmul.f32 %v82, %v82
    %v220 = vmul.f32 %v83, %v83
    %v221 = vmul.f32 %v84, %v84
    %v222 = vmul.f32 %v85, %v85
    %v223 = vmul.f32 %v86, %v86
    %v224 = vmul.f32 %v87, %v87
    %v225 = vmul.f32 %v88, %v88
    %v226 = vmul.f32 %v89, %v89
    %v227 = vmul.f32 %v90, %v90
    %v228 = vmul.f32 %v91, %v91
    %v229 = vmul.f32 %v92, %v92
    %v230 = vmul.f32 %v93, %v93
    %v231 = vmul.f32 %v94, %v94
    %v232 = vmul.f32 %v95, %v95
    %v233 = vadd.f32 %v169, %v170
    %v234 = vadd.f32 %v233, %v171
    %v235 = vadd.f32 %v234, %v172
    %v236 = vadd.f32 %v235, %v173
    %v237 = vadd.f32 %v236, %v174
    %v238 = vadd.f32 %v237, %v175
    %v239 = vadd.f32 %v238, %v176
    %v240 = vadd.f32 %v239, %v177
    %v241 = vadd.f32 %v240, %v178
    %v242 = vadd.f32 %v241, %v179
    %v243 = vadd.f32 %v242, %v180
    %v244 = vadd.f32 %v243, %v181
    %v245 = vadd.f32 %v244, %v182
    %v246 = vadd.f32 %v245, %v183
    %v247 = vadd.f32 %v246, %v184
    %v248 = vadd.f32 %v247, %v185
    %v249 = vadd.f32 %v248, %v186
    %v250 = vadd.f32 %v249, %v187
    %v251 = vadd.f32 %v250, %v188
    %v252 = vadd.f32 %v251, %v189
    %v253 = vadd.f32 %v252, %v190
    %v254 = vadd.f32 %v253, %v191
    %v255 = vadd.f32 %v254, %v192
    %v256 = vadd.f32 %v255, %v193
    %v257 = vadd.f32 %v256, %v194
    %v258 = vadd.f32 %v257, %v195
    %v259 = vadd.f32 %v258, %v196
    %v260 = vadd.f32 %v259, %v197
    %v261 = vadd.f32 %v260, %v198
    %v262 = vadd.f32 %v261, %v199
    %v263 = vadd.f32 %v262, %v200
    %v264 = vadd.f32 %v263, %v201
    %v265 = vadd.f32 %v264, %v202
    %v266 = vadd.f32 %v265, %v203
    %v267 = vadd.f32 %v266, %v204
    %v268 = vadd.f32 %v267, %v205
    %v269 = vadd.f32 %v268, %v206
    %v270 = vadd.f32 %v269, %v207
    %v271 = vadd.f32 %v270, %v208
    %v272 = vadd.f32 %v271, %v209
    %v273 = vadd.f32 %v272, %v210
    %v274 = vadd.f32 %v273, %v211
    %v275 = vadd.f32 %v274, %v212
    %v276 = vadd.f32 %v275, %v213
    %v277 = vadd.f32 %v276, %v214
    %v278 = vadd.f32 %v277, %v215
    %v279 = vadd.f32 %v278, %v216
    %v280 = vadd.f32 %v279, %v217
    %v281 = vadd.f32 %v280, %v218
    %v282 = vadd.f32 %v281, %v219
    %v283 = vadd.f32 %v282, %v220
    %v284 = vadd.f32 %v283, %v221
    %v285 = vadd.f32 %v284, %v222
    %v286 = vadd.f32 %v285, %v223
    %v287 = vadd.f32 %v286, %v224
    %v288 = vadd.f32 %v287, %v225
    %v289 = vadd.f32 %v288, %v226
    %v290 = vadd.f32 %v289, %v227
    %v291 = vadd.f32 %v290, %v228
    %v292 = vadd.f32 %v291, %v229
    %v293 = vadd.f32 %v292, %v230
    %v294 = vadd.f32 %v293, %v231
    %v295 = vadd.f32 %v294, %v232
    %v296 = vrot.slane %v295, 4
    %v297 = vadd.f32 %v295, %v296
    %v298 = vrot.slane %v297, 2
    %v299 = vadd.f32 %v297, %v298
    %v300 = vrot.slane %v299, 1
    %v301 = vadd.f32 %v299, %v300
    %v302 = vadd.f32 %v168, %v301
    %303 = vst [vmem:[#allocation6] sm:$0x1] %v302
    // Predicated region
    $region14: #{tpu_custom_call.1} parent=1 // pred_check
      _
    $region15: #{tpu_custom_call.1} parent=1 // pred_check_branch
      %305 = sbr.rel (0) target = $region17
    $region16: #{tpu_custom_call.1} parent=1 // pred_region
      %s307 = ssub.s32 16, 16
      %308 = vsyncadd [#allocation4], %s307
      %s310 = sshll.u32 [#allocation5], 4
      %s311 = int_to_ptr.vmem [resolvable:$true] %s310
      %313 = dma.vmem_to_hbm [thread:$0]  %s311, 16, %s1, [#allocation4]
    $region17: #{tpu_custom_call.1} parent=1 // pred_fallthru
      _
    // Predicated region
    $region18: #{tpu_custom_call.1} parent=1 // pred_check
      _
    $region19: #{tpu_custom_call.1} parent=1 // pred_check_branch
      %315 = sbr.rel (0) target = $region21
    $region20: #{tpu_custom_call.1} parent=1 // pred_region
      %s317 = ssub.s32 16, 16
      %318 = vsyncadd [#allocation7], %s317
      %s320 = sshll.u32 [#allocation6], 4
      %s321 = int_to_ptr.vmem [resolvable:$true] %s320
      %323 = dma.vmem_to_hbm [thread:$0]  %s321, 16, %s2, [#allocation7]
    $region21: #{tpu_custom_call.1} parent=1 // pred_fallthru
      _
    // Predicated region
    $region22: #{tpu_custom_call.1} parent=1 // pred_check
      _
    $region23: #{tpu_custom_call.1} parent=1 // pred_check_branch
      %325 = sbr.rel (0) target = $region25
    $region24: #{tpu_custom_call.1} parent=1 // pred_region
      %326 = dma.done [#allocation4], 16
    $region25: #{tpu_custom_call.1} parent=1 // pred_fallthru
      _
    // Predicated region
    $region26: #{tpu_custom_call.1} parent=1 // pred_check
      _
    $region27: #{tpu_custom_call.1} parent=1 // pred_check_branch
      %328 = sbr.rel (0) target = $region29
    $region28: #{tpu_custom_call.1} parent=1 // pred_region
      %329 = dma.done [#allocation7], 16
    $region29: #{tpu_custom_call.1} parent=1 // pred_fallthru
      _
    %330 = vsyncpa [#allocation3], 1
    %331 = vsyncpa [#allocation4], 1
    %332 = vsyncpa [#allocation7], 1

</llo_original>
